<compile_context>
chip_gen: v5e
topology: v5e:2x2
jax: 0.10.0
libtpu: 0.0.40
codegen_flags: <defaults>
</compile_context>

<pallas_src>
import functools

import jax
import jax.numpy as jnp
from jax import lax
from jax.experimental import pallas as pl
from jax.experimental.pallas import tpu as pltpu


def _focal_loss_kernel(preds_ref, labels_ref, alpha_ref, out_ref, acc_ref, *,
                       gamma, reduction, n_total):
    pid = pl.program_id(0)
    nsteps = pl.num_programs(0)

    @pl.when(pid == 0)
    def _():
        acc_ref[0, 0] = jnp.float32(0.0)

    x = preds_ref[...].astype(jnp.float32)      # (C, TILE_N) logits, classes on sublanes
    lbl = labels_ref[...]                       # (1, TILE_N) int32
    alpha = alpha_ref[...]                      # (C, 1) f32

    c, tn = x.shape

    # stable log-sum-exp over the class (sublane) axis
    m = jnp.max(x, axis=0, keepdims=True)                      # (1, TILE_N)
    sumexp = jnp.sum(jnp.exp(x - m), axis=0, keepdims=True)    # (1, TILE_N)
    lse = jnp.log(sumexp) + m                                  # (1, TILE_N)

    # gather(label) for both the logit and alpha via a one-hot masked reduce
    cls_ids = lax.broadcasted_iota(jnp.int32, (c, tn), 0)      # (C, TILE_N)
    onehot = cls_ids == lbl                                    # broadcast (1,TILE_N)
    x_lbl = jnp.sum(jnp.where(onehot, x, 0.0), axis=0, keepdims=True)      # (1, TILE_N)
    a = jnp.sum(jnp.where(onehot, alpha, 0.0), axis=0, keepdims=True)      # (1, TILE_N)

    logp = x_lbl - lse                           # log p_label  (<= 0)
    p = jnp.exp(logp)                            # p_label in (0, 1]
    one_minus_p = jnp.maximum(1.0 - p, 0.0)      # guard against f32 rounding

    g = float(gamma)
    if g == 2.0:
        focal = one_minus_p * one_minus_p
    elif g == 1.0:
        focal = one_minus_p
    elif g == 0.0:
        focal = jnp.ones_like(one_minus_p)
    else:
        focal = jnp.power(one_minus_p, g)

    loss = -a * focal * logp                     # (1, TILE_N)

    # mask padded rows of a ragged last tile (trace-time decision)
    if n_total % tn != 0:
        row_ids = pid * tn + lax.broadcasted_iota(jnp.int32, (1, tn), 1)
        loss = jnp.where(row_ids < n_total, loss, 0.0)

    acc_ref[0, 0] += jnp.sum(loss)

    @pl.when(pid == nsteps - 1)
    def _():
        total = acc_ref[0, 0]
        if reduction == "mean":
            out_ref[0, 0] = total / jnp.float32(n_total)
        else:
            out_ref[0, 0] = total


def focal_loss(preds, labels, alpha_vec, *, gamma=2.0, reduction="mean",
               max_tile_n=32768):
    """preds: (..., C) float, labels: (...,) int, alpha_vec: (C,) float."""
    c = preds.shape[-1]
    preds2d = preds.reshape(-1, c)               # keep original dtype (no HBM f32 copy)
    n = preds2d.shape[0]

    # lane-dense layout: classes on sublanes, rows on the 128-wide lane axis
    preds_t = preds2d.T                          # (C, N)
    labels_row = labels.reshape(1, -1).astype(jnp.int32)        # (1, N)
    alpha_col = alpha_vec.reshape(c, 1).astype(jnp.float32)     # (C, 1)

    # Row-tile size: full array if it fits one modest block, otherwise a
    # 128-multiple tile so the grid pipelines DMA against compute.
    if n <= max_tile_n:
        tile_n = n
    else:
        tile_n = max_tile_n                      # multiple of 128
    num_tiles = pl.cdiv(n, tile_n)

    kernel = functools.partial(
        _focal_loss_kernel,
        gamma=float(gamma), reduction=reduction, n_total=int(n))

    out = pl.pallas_call(
        kernel,
        out_shape=jax.ShapeDtypeStruct((1, 1), jnp.float32),
        grid_spec=pltpu.PrefetchScalarGridSpec(
            num_scalar_prefetch=0,
            grid=(num_tiles,),
            in_specs=[
                pl.BlockSpec((c, tile_n), lambda i: (0, i)),
                pl.BlockSpec((1, tile_n), lambda i: (0, i)),
                pl.BlockSpec((c, 1), lambda i: (0, 0)),
            ],
            out_specs=pl.BlockSpec(memory_space=pltpu.SMEM),
            scratch_shapes=[pltpu.SMEM((1, 1), jnp.float32)],
        ),
        compiler_params=pltpu.CompilerParams(
            dimension_semantics=("arbitrary",),      # reduction axis -> shared accumulator
            vmem_limit_bytes=32 * 1024 * 1024,       # safe on v5e/v6e/v7x
        ),
    )(preds_t, labels_row, alpha_col)
    return out[0, 0]


def make_alpha(alpha=0.25, num_classes=2):
    # Matches FocalLoss.__init__ scalar-alpha branch:
    # alpha[0] = alpha; alpha[n] = 1 - alpha for n >= 1
    a = jnp.full((num_classes,), 1.0 - alpha, dtype=jnp.float32)
    a = a.at[0].set(alpha)
    return a


def _reference(preds, labels, alpha_vec, gamma, reduction):
    c = preds.shape[-1]
    p2d = preds.reshape(-1, c).astype(jnp.float32)
    l1d = labels.reshape(-1)
    logsoft = jax.nn.log_softmax(p2d, axis=1)
    logp = jnp.take_along_axis(logsoft, l1d[:, None], axis=1)[:, 0]
    p = jnp.exp(logp)
    a = alpha_vec[l1d]
    loss = -a * (1.0 - p) ** float(gamma) * logp
    return jnp.mean(loss) if reduction == "mean" else jnp.sum(loss)


if __name__ == "__main__":
    key = jax.random.PRNGKey(0)
    k1, k2, k3, k4 = jax.random.split(key, 4)

    # Case 1: module defaults (num_classes=2, gamma=2, mean), N = 2*64 = 128 rows
    num_classes = 2
    batch, seq = 2, 64
    preds = jax.random.normal(k1, (batch, seq, num_classes), dtype=jnp.float32)
    labels = jax.random.randint(k2, (batch, seq), 0, num_classes, dtype=jnp.int32)
    alpha_vec = make_alpha(0.25, num_classes)

    loss = focal_loss(preds, labels, alpha_vec, gamma=2.0, reduction="mean")
    jax.block_until_ready(loss)
    ref = _reference(preds, labels, alpha_vec, 2.0, "mean")
    assert jnp.allclose(loss, ref, rtol=1e-5, atol=1e-6), (loss, ref)

    # Case 2: exercise the gridded/ragged path (N=300 rows, tile=128, sum reduction)
    batch2, seq2 = 3, 100
    preds2 = jax.random.normal(k3, (batch2, seq2, num_classes), dtype=jnp.float32)
    labels2 = jax.random.randint(k4, (batch2, seq2), 0, num_classes, dtype=jnp.int32)
    loss2 = focal_loss(preds2, labels2, alpha_vec, gamma=2.0, reduction="sum",
                       max_tile_n=128)
    jax.block_until_ready(loss2)
    ref2 = _reference(preds2, labels2, alpha_vec, 2.0, "sum")
    assert jnp.allclose(loss2, ref2, rtol=1e-4, atol=1e-5), (loss2, ref2)

    print("KERNEL_OK")
</pallas_src>

<mosaic_0001>
module attributes {stable_mosaic.version = 11 : i64} {
  func.func @_focal_loss_kernel(%arg0: i32, %arg1: memref<2x128xf32, #tpu.memory_space<vmem>>, %arg2: memref<1x128xi32, #tpu.memory_space<vmem>>, %arg3: memref<2x1xf32, #tpu.memory_space<vmem>>, %arg4: memref<1x1xf32, #tpu.memory_space<smem>>, %arg5: memref<1x1xf32, #tpu.memory_space<smem>>) attributes {dimension_semantics = [#tpu.dimension_semantics<arbitrary>], iteration_bounds = array<i64: 1>, scalar_prefetch = 0 : i64, scratch_operands = 1 : i64, tpu.core_type = #tpu.core_type<tc>, window_params = [{transform_indices = @transform_0, window_bounds = array<i64: 2, 128>}, {transform_indices = @transform_1, window_bounds = array<i64: 1, 128>}, {pipeline_mode = #tpu.pipeline_mode<synchronous>, transform_indices = @transform_2, window_bounds = array<i64: 2, 1>}, {transform_indices = @transform_3, window_bounds = array<i64: 1, 1>}]} {
    %c0_i32 = arith.constant 0 : i32
    %0 = arith.cmpi eq, %arg0, %c0_i32 : i32
    %1 = arith.extui %0 : i1 to i32
    %c0_i32_0 = arith.constant 0 : i32
    %2 = arith.cmpi ne, %1, %c0_i32_0 : i32
    scf.if %2 {
      %cst_21 = arith.constant 0.000000e+00 : f32
      %c0_22 = arith.constant 0 : index
      %c0_23 = arith.constant 0 : index
      %49 = memref.load %arg5[%c0_22, %c0_23] : memref<1x1xf32, #tpu.memory_space<smem>>
      memref.store %cst_21, %arg5[%c0_22, %c0_23] : memref<1x1xf32, #tpu.memory_space<smem>>
    } else {
    }
    %c0 = arith.constant 0 : index
    %c0_1 = arith.constant 0 : index
    %3 = vector.load %arg1[%c0, %c0_1] : memref<2x128xf32, #tpu.memory_space<vmem>>, vector<2x128xf32>
    %c0_2 = arith.constant 0 : index
    %c0_3 = arith.constant 0 : index
    %4 = vector.load %arg2[%c0_2, %c0_3] : memref<1x128xi32, #tpu.memory_space<vmem>>, vector<1x128xi32>
    %c0_4 = arith.constant 0 : index
    %c0_5 = arith.constant 0 : index
    %5 = vector.load %arg3[%c0_4, %c0_5] : memref<2x1xf32, #tpu.memory_space<vmem>>, vector<2x1xf32>
    %cst = arith.constant dense<0xFF800000> : vector<128xf32>
    %6 = vector.multi_reduction <maximumf>, %3, %cst [0] : vector<2x128xf32> to vector<128xf32>
    %7 = vector.shape_cast %6 : vector<128xf32> to vector<1x128xf32>
    %8 = vector.broadcast %7 : vector<1x128xf32> to vector<2x128xf32>
    %9 = arith.subf %3, %8 : vector<2x128xf32>
    %10 = math.exp %9 : vector<2x128xf32>
    %cst_6 = arith.constant dense<0.000000e+00> : vector<128xf32>
    %11 = vector.multi_reduction <add>, %10, %cst_6 [0] : vector<2x128xf32> to vector<128xf32>
    %12 = vector.shape_cast %11 : vector<128xf32> to vector<1x128xf32>
    %13 = math.log %12 : vector<1x128xf32>
    %14 = arith.addf %13, %7 : vector<1x128xf32>
    %15 = tpu.iota {dimensions = array<i32: 0>} : vector<2x128xi32>
    %16 = vector.broadcast %4 : vector<1x128xi32> to vector<2x128xi32>
    %17 = arith.cmpi eq, %15, %16 : vector<2x128xi32>
    %cst_7 = arith.constant 0.000000e+00 : f32
    %18 = vector.broadcast %cst_7 : f32 to vector<2x128xf32>
    %19 = arith.select %17, %3, %18 : vector<2x128xi1>, vector<2x128xf32>
    %cst_8 = arith.constant dense<0.000000e+00> : vector<128xf32>
    %20 = vector.multi_reduction <add>, %19, %cst_8 [0] : vector<2x128xf32> to vector<128xf32>
    %21 = vector.shape_cast %20 : vector<128xf32> to vector<1x128xf32>
    %cst_9 = arith.constant 0.000000e+00 : f32
    %22 = vector.shape_cast %5 : vector<2x1xf32> to vector<2x1xf32>
    %23 = vector.broadcast %22 : vector<2x1xf32> to vector<2x128xf32>
    %24 = vector.broadcast %cst_9 : f32 to vector<2x128xf32>
    %25 = arith.select %17, %23, %24 : vector<2x128xi1>, vector<2x128xf32>
    %cst_10 = arith.constant dense<0.000000e+00> : vector<128xf32>
    %26 = vector.multi_reduction <add>, %25, %cst_10 [0] : vector<2x128xf32> to vector<128xf32>
    %27 = vector.shape_cast %26 : vector<128xf32> to vector<1x128xf32>
    %28 = arith.subf %21, %14 : vector<1x128xf32>
    %29 = math.exp %28 : vector<1x128xf32>
    %cst_11 = arith.constant 1.000000e+00 : f32
    %30 = vector.broadcast %cst_11 : f32 to vector<1x128xf32>
    %31 = arith.subf %30, %29 : vector<1x128xf32>
    %cst_12 = arith.constant 0.000000e+00 : f32
    %32 = vector.broadcast %cst_12 : f32 to vector<1x128xf32>
    %33 = arith.maximumf %31, %32 : vector<1x128xf32>
    %34 = arith.mulf %33, %33 : vector<1x128xf32>
    %cst_13 = arith.constant 0.000000e+00 : f32
    %35 = vector.broadcast %cst_13 : f32 to vector<1x128xf32>
    %36 = arith.subf %35, %27 : vector<1x128xf32>
    %37 = arith.mulf %36, %34 : vector<1x128xf32>
    %38 = arith.mulf %37, %28 : vector<1x128xf32>
    %c0_14 = arith.constant 0 : index
    %c0_15 = arith.constant 0 : index
    %39 = memref.load %arg5[%c0_14, %c0_15] : memref<1x1xf32, #tpu.memory_space<smem>>
    %40 = vector.shape_cast %38 : vector<1x128xf32> to vector<1x1x128xf32>
    %cst_16 = arith.constant dense<0.000000e+00> : vector<1xf32>
    %41 = vector.multi_reduction <add>, %40, %cst_16 [1, 2] : vector<1x1x128xf32> to vector<1xf32>
    %42 = vector.shape_cast %41 : vector<1xf32> to vector<1x1x1xf32>
    %43 = vector.extract %42[0, 0, 0] : f32 from vector<1x1x1xf32>
    %44 = arith.addf %39, %43 : f32
    %c0_17 = arith.constant 0 : index
    %c0_18 = arith.constant 0 : index
    %45 = memref.load %arg5[%c0_17, %c0_18] : memref<1x1xf32, #tpu.memory_space<smem>>
    memref.store %44, %arg5[%c0_17, %c0_18] : memref<1x1xf32, #tpu.memory_space<smem>>
    %c0_i32_19 = arith.constant 0 : i32
    %46 = arith.cmpi eq, %arg0, %c0_i32_19 : i32
    %47 = arith.extui %46 : i1 to i32
    %c0_i32_20 = arith.constant 0 : i32
    %48 = arith.cmpi ne, %47, %c0_i32_20 : i32
    scf.if %48 {
      %c0_21 = arith.constant 0 : index
      %c0_22 = arith.constant 0 : index
      %49 = memref.load %arg5[%c0_21, %c0_22] : memref<1x1xf32, #tpu.memory_space<smem>>
      %cst_23 = arith.constant 1.280000e+02 : f32
      %50 = arith.divf %49, %cst_23 : f32
      %c0_24 = arith.constant 0 : index
      %c0_25 = arith.constant 0 : index
      %51 = memref.load %arg4[%c0_24, %c0_25] : memref<1x1xf32, #tpu.memory_space<smem>>
      memref.store %50, %arg4[%c0_24, %c0_25] : memref<1x1xf32, #tpu.memory_space<smem>>
    } else {
    }
    return
  }
  func.func @transform_0(%arg0: i32) -> (i32, i32) {
    %c0_i32 = arith.constant 0 : i32
    %c0_i32_0 = arith.constant 0 : i32
    return %c0_i32, %arg0 : i32, i32
  }
  func.func @transform_1(%arg0: i32) -> (i32, i32) {
    %c0_i32 = arith.constant 0 : i32
    %c0_i32_0 = arith.constant 0 : i32
    return %c0_i32, %arg0 : i32, i32
  }
  func.func @transform_2(%arg0: i32) -> (i32, i32) {
    %c0_i32 = arith.constant 0 : i32
    %c0_i32_0 = arith.constant 0 : i32
    %c0_i32_1 = arith.constant 0 : i32
    return %c0_i32, %c0_i32_0 : i32, i32
  }
  func.func @transform_3(%arg0: i32) -> (i32, i32) {
    %c0_i32 = arith.constant 0 : i32
    %c0_i32_0 = arith.constant 0 : i32
    %c0_i32_1 = arith.constant 0 : i32
    return %c0_i32, %c0_i32_0 : i32, i32
  }
}

</mosaic_0001>

<llo_original>
// kernel: tpu_custom_call.1
$region0: #{tpu_custom_call.1}
  #allocation0 [shape = 'u32[]', space=smem, size = 0x4, offset = 0x4, fixed_abs, tag = 'smem constant byte address 0x4 - core index']
  #allocation1 [shape = 'u32[72,128]{1,0:T(1,128)}', space=vmem, size = 0x9000, scoped, tag = 'internal scratch']
  #allocation2 [shape = 'f32[1,1]{1,0:T(1,128)}', space=smem, size = 0x200, scoped, tag = 'scratch operand']
  %s0 = inlined_call_operand.vmem [shape: f32[2,128], index: 0, kind: input, shape index: {}]
  %s1 = inlined_call_operand.vmem [shape: s32[1,128], index: 1, kind: input, shape index: {}]
  %s2 = inlined_call_operand.vmem [shape: f32[2,1], index: 2, kind: input, shape index: {}]
  %s3 = inlined_call_operand.hbm [shape: f32[1,1], index: 3, kind: output, shape index: {}]
  %s4 = sld [smem:[#allocation0]]
  $region30: #{tpu_custom_call.1} parent=0
    _
  %s6 = ssub.s32 1, %s4
  %s7 = scalar_select 0, %s6, %s4
  $region1: #{tpu_custom_call.1} parent=0
    #allocation3 [shape = 'u8[512]{0}', space=smem, size = 0x200, scoped, tag = 'output window, operand 0, single buffered']
    #allocation4 [shape = 's32[1]{0}', space=sflag, size = 0x4, scoped, tag = 'scoped memory for tpu_custom_call.1']
    %8 = vsyncpa [#allocation4], 0
    // Predicated region
    $region2: #{tpu_custom_call.1} parent=1 // pred_check
      _
    $region3: #{tpu_custom_call.1} parent=1 // pred_check_branch
      %10 = sbr.rel (0) target = $region5
    $region4: #{tpu_custom_call.1} parent=1 // pred_region
      _
    $region5: #{tpu_custom_call.1} parent=1 // pred_fallthru
      _
    // Predicated region
    $region6: #{tpu_custom_call.1} parent=1 // pred_check
      _
    $region7: #{tpu_custom_call.1} parent=1 // pred_check_branch
      %12 = sbr.rel (0) target = $region9
    $region8: #{tpu_custom_call.1} parent=1 // pred_region
      _
    $region9: #{tpu_custom_call.1} parent=1 // pred_fallthru
      _
    // Predicated region
    $region10: #{tpu_custom_call.1} parent=1 // pred_check
      _
    $region11: #{tpu_custom_call.1} parent=1 // pred_check_branch
      %14 = sbr.rel (0) target = $region13
    $region12: #{tpu_custom_call.1} parent=1 // pred_region
      _
    $region13: #{tpu_custom_call.1} parent=1 // pred_fallthru
      _
    %p15 = scmp.eq.s32.totalorder 0, 0
    // Predicated region
    $region14: #{tpu_custom_call.1} parent=1 // pred_check
      %p16 = pneg %p15
    $region15: #{tpu_custom_call.1} parent=1 // pred_check_branch
      %18 = sbr.rel (%p16) target = $region17
    $region16: #{tpu_custom_call.1} parent=1 // pred_region
      %s19 = scalar_lea.smem [#allocation2], 0
      %20 = sst [smem:[%s19]] 0.0
    $region17: #{tpu_custom_call.1} parent=1 // pred_fallthru
      _
    %v21 = vld [vmem:[%s0] sm:$0x3]
    %v22 = vld [vmem:[%s1] sm:$0x1]
    %v23 = vld [vmem:[%s2] sm:$0x3]
    %vm24 = vcmask 1041408
    %v25 = vsel %vm24, %v21, -inf
    %v26 = vrot.slane %v25, 4
    %v27 = vmax.f32 %v25, %v26
    %v28 = vrot.slane %v27, 2
    %v29 = vmax.f32 %v27, %v28
    %v30 = vrot.slane %v29, 1
    %v31 = vmax.f32 %v29, %v30
    %v32 = vsub.f32 %v21, %v31
    %v33 = vmul.f32 %v32, 1.442695
    %v34 = vpow.pop %v33
    %v35 = vsel %vm24, %v34, 0.0
    %v36 = vrot.slane %v35, 4
    %v37 = vadd.f32 %v35, %v36
    %v38 = vrot.slane %v37, 2
    %v39 = vadd.f32 %v37, %v38
    %v40 = vrot.slane %v39, 1
    %v41 = vadd.f32 %v39, %v40
    %v42 = vlog2.pop %v41
    %v43 = vmul.f32 %v42, 0.6931472
    %v44 = vadd.f32 %v43, %v31
    %v45 = vlaneseq
    %v46 = vshrl.u32 %v45, 7
    %v47 = vperm.slane %v22, 0
    %vm48 = vcmp.eq.s32.totalorder %v46, %v47
    %v49 = vsel %vm48, %v21, 0.0
    %v50 = vsel %vm24, %v49, 0.0
    %v51 = vrot.slane %v50, 4
    %v52 = vadd.f32 %v50, %v51
    %v53 = vrot.slane %v52, 2
    %v54 = vadd.f32 %v52, %v53
    %v55 = vrot.slane %v54, 1
    %v56 = vadd.f32 %v54, %v55
    %58 = vset.pattern.permute.xlu0 0
    %59 = vperm.xlu0 %58, %v23
    %v60 = vpop.permute.xlu0 %59
    %v62 = vsel %vm48, %v60, 0.0
    %v63 = vsel %vm24, %v62, 0.0
    %v64 = vrot.slane %v63, 4
    %v65 = vadd.f32 %v63, %v64
    %v66 = vrot.slane %v65, 2
    %v67 = vadd.f32 %v65, %v66
    %v68 = vrot.slane %v67, 1
    %v69 = vadd.f32 %v67, %v68
    %v70 = vsub.f32 %v56, %v44
    %v71 = vmul.f32 %v70, 1.442695
    %v72 = vpow.pop %v71
    %v73 = vsub.f32 1.0, %v72
    %v74 = vmax.f32 %v73, 0.0
    %v75 = vmul.f32 %v74, %v74
    %v76 = vsub.f32 0.0, %v69
    %v77 = vmul.f32 %v76, %v75
    %v78 = vmul.f32 %v77, %v70
    %s79 = sld [smem:[#allocation2]]
    %vm80 = vcmask 1040384
    %v81 = vsel %vm80, %v78, 0.0
    %82 = vadd.xlane.f32.xlu0 %v81
    %v83 = vpop.xlane.xlu0 %82
    %v84 = vrot.slane %v83, 4
    %v85 = vadd.f32 %v83, %v84
    %v86 = vrot.slane %v85, 2
    %v87 = vadd.f32 %v85, %v86
    %v88 = vrot.slane %v87, 1
    %v89 = vadd.f32 %v87, %v88
    %s90 = vtos %v89
    %s91 = sadd.f32 %s79, %s90
    %s92 = scalar_lea.smem [#allocation2], 0
    %93 = sst [smem:[%s92]] %s91
    // Predicated region
    $region18: #{tpu_custom_call.1} parent=1 // pred_check
      %p94 = pneg %p15
    $region19: #{tpu_custom_call.1} parent=1 // pred_check_branch
      %96 = sbr.rel (%p94) target = $region21
    $region20: #{tpu_custom_call.1} parent=1 // pred_region
      %s97 = sld [smem:[#allocation2]]
      %v98 = vrcp.pop 128.0
      %v99 = vmul.f32 128.0, %v98
      %v100 = vsub.f32 1.0, %v99
      %v101 = vmul.f32 %v98, %v100
      %v102 = vadd.f32 %v98, %v101
      %vm103 = vweird.f32 %v98
      %v104 = vsel %vm103, %v98, %v102
      %s105 = vtos %v104
      %s106 = smul.f32 %s97, %s105
      %s107 = scalar_lea.smem [#allocation3], 0
      %108 = sst [smem:[%s107]] %s106
    $region21: #{tpu_custom_call.1} parent=1 // pred_fallthru
      _
    // Predicated region
    $region22: #{tpu_custom_call.1} parent=1 // pred_check
      _
    $region23: #{tpu_custom_call.1} parent=1 // pred_check_branch
      %110 = sbr.rel (0) target = $region25
    $region24: #{tpu_custom_call.1} parent=1 // pred_region
      %112 = vsyncadd [#allocation4], 0
      %s114 = sshll.u32 %s3, 4
      %s115 = int_to_ptr.hbm [resolvable:$true] %s114
      %117 = dma.smem_to_hbm [#allocation3], 16, %s115, [#allocation4]
    $region25: #{tpu_custom_call.1} parent=1 // pred_fallthru
      _
    // Predicated region
    $region26: #{tpu_custom_call.1} parent=1 // pred_check
      _
    $region27: #{tpu_custom_call.1} parent=1 // pred_check_branch
      %119 = sbr.rel (0) target = $region29
    $region28: #{tpu_custom_call.1} parent=1 // pred_region
      %121 = dma.done [#allocation4], 16
    $region29: #{tpu_custom_call.1} parent=1 // pred_fallthru
      _
    %122 = sfence
    %123 = vsyncpa [#allocation4], 1

</llo_original>
